<compile_context>
chip_gen: v6e
topology: v6e:2x2x1
jax: 0.10.0
libtpu: 0.0.40
codegen_flags: <defaults>
</compile_context>

<pallas_src>
import jax
import jax.numpy as jnp
from jax.experimental import pallas as pl
from jax.experimental.pallas import tpu as pltpu

_H1, _H2, _H3 = 512, 256, 128  # lane-padded layer widths (for 500, 200, 1)


def _round_up(n, m):
    return ((n + m - 1) // m) * m


def critic_kernel(x_ref, w1_ref, b1_ref, w2_ref, b2_ref, w3_ref, b3_ref, o_ref):
    # One batch tile; all three matmuls run back-to-back on the MXU with the
    # bias-add + ReLU fused on the VPU.  Weights are (possibly) bf16; all
    # accumulation is f32.
    wdt = w1_ref.dtype
    x = x_ref[...].astype(wdt)
    h1 = jnp.dot(x, w1_ref[...], preferred_element_type=jnp.float32) + b1_ref[...]
    h1 = jnp.maximum(h1, 0.0)
    h2 = jnp.dot(h1.astype(wdt), w2_ref[...],
                 preferred_element_type=jnp.float32) + b2_ref[...]
    h2 = jnp.maximum(h2, 0.0)
    h3 = jnp.dot(h2.astype(wdt), w3_ref[...],
                 preferred_element_type=jnp.float32) + b3_ref[...]
    h3 = jnp.maximum(h3, 0.0)
    o_ref[...] = h3.astype(o_ref.dtype)  # lane-dense (TB, 128) store


def init_params(key, state_dim):
    """PyTorch-like uniform(-1/sqrt(in), 1/sqrt(in)) init, unpadded f32."""
    dims = [(state_dim, 500), (500, 200), (200, 1)]
    params = {}
    keys = jax.random.split(key, 2 * len(dims))
    for i, (din, dout) in enumerate(dims):
        bound = 1.0 / float(din) ** 0.5
        params[f"w{i + 1}"] = jax.random.uniform(
            keys[2 * i], (din, dout), jnp.float32, -bound, bound)
        params[f"b{i + 1}"] = jax.random.uniform(
            keys[2 * i + 1], (1, dout), jnp.float32, -bound, bound)
    return params


def prepare_params(params, weight_dtype=jnp.bfloat16):
    """Zero-pad feature dims to lane multiples and cast weights.

    w1 (D,500)->(D,512), w2 (500,200)->(512,256), w3 (200,1)->(256,128).
    Padded entries are zero and ReLU keeps them zero, so column 0 of the last
    layer is identical to the unpadded computation.  Biases stay f32 (tiny).
    """
    D = params["w1"].shape[0]

    def pad(a, shape, dtype):
        out = jnp.zeros(shape, dtype)
        return out.at[: a.shape[0], : a.shape[1]].set(a.astype(dtype))

    return {
        "w1": pad(params["w1"], (D, _H1), weight_dtype),
        "b1": pad(params["b1"], (1, _H1), jnp.float32),
        "w2": pad(params["w2"], (_H1, _H2), weight_dtype),
        "b2": pad(params["b2"], (1, _H2), jnp.float32),
        "w3": pad(params["w3"], (_H2, _H3), weight_dtype),
        "b3": pad(params["b3"], (1, _H3), jnp.float32),
    }


def critic_forward(x, prep, *, tb_max=1024):
    """Pallas implementation of Critic.forward.

    x: (B, state_dim) or (state_dim,) f32; prep: output of prepare_params.
    Returns (B, 1) f32.  tb_max is the batch tile; 1024 fits v7x VMEM easily.
    """
    if x.ndim == 1:  # mirrors the unsqueeze(0) in PyTorch
        x = x[None, :]
    x = x.astype(jnp.float32)
    B, D = x.shape

    TB = min(tb_max, _round_up(B, 8))        # multiple of 8 sublanes
    B_pad = _round_up(B, TB)
    if B_pad != B:
        x = jnp.pad(x, ((0, B_pad - B), (0, 0)))
    grid = (B_pad // TB,)

    out = pl.pallas_call(
        critic_kernel,
        out_shape=jax.ShapeDtypeStruct((B_pad, _H3), jnp.float32),
        grid=grid,
        in_specs=[
            pl.BlockSpec((TB, D), lambda i: (i, 0)),      # x: batch-tiled
            pl.BlockSpec((D, _H1), lambda i: (0, 0)),     # weights: resident
            pl.BlockSpec((1, _H1), lambda i: (0, 0)),
            pl.BlockSpec((_H1, _H2), lambda i: (0, 0)),
            pl.BlockSpec((1, _H2), lambda i: (0, 0)),
            pl.BlockSpec((_H2, _H3), lambda i: (0, 0)),
            pl.BlockSpec((1, _H3), lambda i: (0, 0)),
        ],
        out_specs=pl.BlockSpec((TB, _H3), lambda i: (i, 0)),
        compiler_params=pltpu.CompilerParams(
            dimension_semantics=("parallel",),            # shard batch on v7x
        ),
    )(x, prep["w1"], prep["b1"], prep["w2"], prep["b2"], prep["w3"], prep["b3"])

    return out[:B, :1]


def critic_ref(x, params):
    """Pure-f32 reference matching the PyTorch module."""
    if x.ndim == 1:
        x = x[None, :]
    h = jnp.maximum(x @ params["w1"] + params["b1"], 0.0)
    h = jnp.maximum(h @ params["w2"] + params["b2"], 0.0)
    return jnp.maximum(h @ params["w3"] + params["b3"], 0.0)


def critic_ref_matched(x, prep):
    """Reference applying the same bf16 rounding / casts as the kernel."""
    if x.ndim == 1:
        x = x[None, :]
    f32 = jnp.float32
    wdt = prep["w1"].dtype
    h = x.astype(wdt).astype(f32) @ prep["w1"].astype(f32) + prep["b1"]
    h = jnp.maximum(h, 0.0)
    h = h.astype(wdt).astype(f32) @ prep["w2"].astype(f32) + prep["b2"]
    h = jnp.maximum(h, 0.0)
    h = h.astype(wdt).astype(f32) @ prep["w3"].astype(f32) + prep["b3"]
    h = jnp.maximum(h, 0.0)
    return h[:, :1]


if __name__ == "__main__":
    key = jax.random.PRNGKey(0)
    kp, kx, kx2 = jax.random.split(key, 3)

    batch, state_dim = 2, 32
    params = init_params(kp, state_dim)
    prep = prepare_params(params)                 # padded + bf16 weights

    # --- small batch (B=2), single tile ------------------------------------
    x = jax.random.normal(kx, (batch, state_dim), jnp.float32)
    out = jax.block_until_ready(critic_forward(x, prep))
    assert out.shape == (batch, 1)
    ref_m = critic_ref_matched(x, prep)
    assert jnp.allclose(out, ref_m, atol=1e-3, rtol=1e-3), "mismatch vs matched ref"
    ref_f32 = critic_ref(x, params)
    assert jnp.allclose(out, ref_f32, atol=5e-2, rtol=5e-2), "mismatch vs f32 ref"

    # --- 1-D input path (unsqueeze) -----------------------------------------
    out1 = jax.block_until_ready(critic_forward(x[0], prep))
    assert out1.shape == (1, 1)
    assert jnp.allclose(out1, out[:1], atol=1e-3, rtol=1e-3)

    # --- larger, non-multiple batch exercising the parallel grid + padding --
    xb = jax.random.normal(kx2, (300, state_dim), jnp.float32)
    outb = jax.block_until_ready(critic_forward(xb, prep, tb_max=128))
    assert outb.shape == (300, 1)
    refb = critic_ref_matched(xb, prep)
    assert jnp.allclose(outb, refb, atol=1e-3, rtol=1e-3), "mismatch on tiled batch"

    print("KERNEL_OK")
</pallas_src>

<mosaic_0001>
module attributes {stable_mosaic.version = 11 : i64} {
  func.func @critic_kernel(%arg0: i32, %arg1: memref<8x32xf32, #tpu.memory_space<vmem>>, %arg2: memref<32x512xbf16, #tpu.memory_space<vmem>>, %arg3: memref<1x512xf32, #tpu.memory_space<vmem>>, %arg4: memref<512x256xbf16, #tpu.memory_space<vmem>>, %arg5: memref<1x256xf32, #tpu.memory_space<vmem>>, %arg6: memref<256x128xbf16, #tpu.memory_space<vmem>>, %arg7: memref<1x128xf32, #tpu.memory_space<vmem>>, %arg8: memref<8x128xf32, #tpu.memory_space<vmem>>) attributes {dimension_semantics = [#tpu.dimension_semantics<parallel>], iteration_bounds = array<i64: 1>, scalar_prefetch = 0 : i64, scratch_operands = 0 : i64, tpu.core_type = #tpu.core_type<tc>, window_params = [{transform_indices = @transform_0, window_bounds = array<i64: 8, 32>}, {pipeline_mode = #tpu.pipeline_mode<synchronous>, transform_indices = @transform_1, window_bounds = array<i64: 32, 512>}, {pipeline_mode = #tpu.pipeline_mode<synchronous>, transform_indices = @transform_2, window_bounds = array<i64: 1, 512>}, {pipeline_mode = #tpu.pipeline_mode<synchronous>, transform_indices = @transform_3, window_bounds = array<i64: 512, 256>}, {pipeline_mode = #tpu.pipeline_mode<synchronous>, transform_indices = @transform_4, window_bounds = array<i64: 1, 256>}, {pipeline_mode = #tpu.pipeline_mode<synchronous>, transform_indices = @transform_5, window_bounds = array<i64: 256, 128>}, {pipeline_mode = #tpu.pipeline_mode<synchronous>, transform_indices = @transform_6, window_bounds = array<i64: 1, 128>}, {transform_indices = @transform_7, window_bounds = array<i64: 8, 128>}]} {
    %c0 = arith.constant 0 : index
    %c0_0 = arith.constant 0 : index
    %0 = vector.load %arg1[%c0, %c0_0] : memref<8x32xf32, #tpu.memory_space<vmem>>, vector<8x32xf32>
    %1 = arith.truncf %0 : vector<8x32xf32> to vector<8x32xbf16>
    %c0_1 = arith.constant 0 : index
    %c0_2 = arith.constant 0 : index
    %2 = vector.load %arg2[%c0_1, %c0_2] : memref<32x512xbf16, #tpu.memory_space<vmem>>, vector<32x512xbf16>
    %cst = arith.constant dense<0.000000e+00> : vector<8x512xf32>
    %3 = tpu.matmul %1, %2, %cst {dimension_numbers = #tpu.dot_dimension_numbers<[1], [0], [0], [1], [0, 0, 1, 1], [], []>} : vector<8x32xbf16>, vector<32x512xbf16>, vector<8x512xf32> -> vector<8x512xf32>
    %c0_3 = arith.constant 0 : index
    %c0_4 = arith.constant 0 : index
    %4 = vector.load %arg3[%c0_3, %c0_4] : memref<1x512xf32, #tpu.memory_space<vmem>>, vector<1x512xf32>
    %5 = vector.broadcast %4 : vector<1x512xf32> to vector<8x512xf32>
    %6 = arith.addf %3, %5 : vector<8x512xf32>
    %cst_5 = arith.constant 0.000000e+00 : f32
    %7 = vector.broadcast %cst_5 : f32 to vector<8x512xf32>
    %8 = arith.maximumf %6, %7 : vector<8x512xf32>
    %9 = arith.truncf %8 : vector<8x512xf32> to vector<8x512xbf16>
    %c0_6 = arith.constant 0 : index
    %c0_7 = arith.constant 0 : index
    %10 = vector.load %arg4[%c0_6, %c0_7] : memref<512x256xbf16, #tpu.memory_space<vmem>>, vector<512x256xbf16>
    %cst_8 = arith.constant dense<0.000000e+00> : vector<8x256xf32>
    %11 = tpu.matmul %9, %10, %cst_8 {dimension_numbers = #tpu.dot_dimension_numbers<[1], [0], [0], [1], [0, 0, 1, 1], [], []>} : vector<8x512xbf16>, vector<512x256xbf16>, vector<8x256xf32> -> vector<8x256xf32>
    %c0_9 = arith.constant 0 : index
    %c0_10 = arith.constant 0 : index
    %12 = vector.load %arg5[%c0_9, %c0_10] : memref<1x256xf32, #tpu.memory_space<vmem>>, vector<1x256xf32>
    %13 = vector.broadcast %12 : vector<1x256xf32> to vector<8x256xf32>
    %14 = arith.addf %11, %13 : vector<8x256xf32>
    %cst_11 = arith.constant 0.000000e+00 : f32
    %15 = vector.broadcast %cst_11 : f32 to vector<8x256xf32>
    %16 = arith.maximumf %14, %15 : vector<8x256xf32>
    %17 = arith.truncf %16 : vector<8x256xf32> to vector<8x256xbf16>
    %c0_12 = arith.constant 0 : index
    %c0_13 = arith.constant 0 : index
    %18 = vector.load %arg6[%c0_12, %c0_13] : memref<256x128xbf16, #tpu.memory_space<vmem>>, vector<256x128xbf16>
    %cst_14 = arith.constant dense<0.000000e+00> : vector<8x128xf32>
    %19 = tpu.matmul %17, %18, %cst_14 {dimension_numbers = #tpu.dot_dimension_numbers<[1], [0], [0], [1], [0, 0, 1, 1], [], []>} : vector<8x256xbf16>, vector<256x128xbf16>, vector<8x128xf32> -> vector<8x128xf32>
    %c0_15 = arith.constant 0 : index
    %c0_16 = arith.constant 0 : index
    %20 = vector.load %arg7[%c0_15, %c0_16] : memref<1x128xf32, #tpu.memory_space<vmem>>, vector<1x128xf32>
    %21 = vector.broadcast %20 : vector<1x128xf32> to vector<8x128xf32>
    %22 = arith.addf %19, %21 : vector<8x128xf32>
    %cst_17 = arith.constant 0.000000e+00 : f32
    %23 = vector.broadcast %cst_17 : f32 to vector<8x128xf32>
    %24 = arith.maximumf %22, %23 : vector<8x128xf32>
    %c0_18 = arith.constant 0 : index
    %c0_19 = arith.constant 0 : index
    %25 = vector.load %arg8[%c0_18, %c0_19] : memref<8x128xf32, #tpu.memory_space<vmem>>, vector<8x128xf32>
    tpu.vector_store %arg8[%c0_18, %c0_19], %24 {strides = array<i32>} : memref<8x128xf32, #tpu.memory_space<vmem>>, vector<8x128xf32>,
    return
  }
  func.func @transform_0(%arg0: i32) -> (i32, i32) {
    %c0_i32 = arith.constant 0 : i32
    %c0_i32_0 = arith.constant 0 : i32
    return %arg0, %c0_i32 : i32, i32
  }
  func.func @transform_1(%arg0: i32) -> (i32, i32) {
    %c0_i32 = arith.constant 0 : i32
    %c0_i32_0 = arith.constant 0 : i32
    %c0_i32_1 = arith.constant 0 : i32
    return %c0_i32, %c0_i32_0 : i32, i32
  }
  func.func @transform_2(%arg0: i32) -> (i32, i32) {
    %c0_i32 = arith.constant 0 : i32
    %c0_i32_0 = arith.constant 0 : i32
    %c0_i32_1 = arith.constant 0 : i32
    return %c0_i32, %c0_i32_0 : i32, i32
  }
  func.func @transform_3(%arg0: i32) -> (i32, i32) {
    %c0_i32 = arith.constant 0 : i32
    %c0_i32_0 = arith.constant 0 : i32
    %c0_i32_1 = arith.constant 0 : i32
    return %c0_i32, %c0_i32_0 : i32, i32
  }
  func.func @transform_4(%arg0: i32) -> (i32, i32) {
    %c0_i32 = arith.constant 0 : i32
    %c0_i32_0 = arith.constant 0 : i32
    %c0_i32_1 = arith.constant 0 : i32
    return %c0_i32, %c0_i32_0 : i32, i32
  }
  func.func @transform_5(%arg0: i32) -> (i32, i32) {
    %c0_i32 = arith.constant 0 : i32
    %c0_i32_0 = arith.constant 0 : i32
    %c0_i32_1 = arith.constant 0 : i32
    return %c0_i32, %c0_i32_0 : i32, i32
  }
  func.func @transform_6(%arg0: i32) -> (i32, i32) {
    %c0_i32 = arith.constant 0 : i32
    %c0_i32_0 = arith.constant 0 : i32
    %c0_i32_1 = arith.constant 0 : i32
    return %c0_i32, %c0_i32_0 : i32, i32
  }
  func.func @transform_7(%arg0: i32) -> (i32, i32) {
    %c0_i32 = arith.constant 0 : i32
    %c0_i32_0 = arith.constant 0 : i32
    return %arg0, %c0_i32 : i32, i32
  }
}

</mosaic_0001>

<llo_original>
// kernel: tpu_custom_call.1
$region0: #{tpu_custom_call.1}
  #allocation0 [shape = 'u32[]', space=smem, size = 0x4, offset = 0x4, fixed_abs, tag = 'smem constant byte address 0x4 - core index']
  #allocation1 [shape = 'u32[144,128]{1,0:T(1,128)}', space=vmem, size = 0x12000, scoped, tag = 'internal scratch']
  %s0 = inlined_call_operand.hbm [shape: f32[8,32], index: 0, kind: input, shape index: {}]
  %s1 = inlined_call_operand.hbm [shape: bf16[32,512], index: 1, kind: input, shape index: {}]
  %s2 = inlined_call_operand.hbm [shape: f32[1,512], index: 2, kind: input, shape index: {}]
  %s3 = inlined_call_operand.hbm [shape: bf16[512,256], index: 3, kind: input, shape index: {}]
  %s4 = inlined_call_operand.vmem [shape: f32[1,256], index: 4, kind: input, shape index: {}]
  %s5 = inlined_call_operand.hbm [shape: bf16[256,128], index: 5, kind: input, shape index: {}]
  %s6 = inlined_call_operand.vmem [shape: f32[1,128], index: 6, kind: input, shape index: {}]
  %s7 = inlined_call_operand.hbm [shape: f32[8,128], index: 7, kind: output, shape index: {}]
  %s8 = sld [smem:[#allocation0]]
  $region58: #{tpu_custom_call.1} parent=0
    _
  %s10 = ssub.s32 1, %s8
  %s11 = scalar_select 0, %s10, %s8
  $region1: #{tpu_custom_call.1} parent=0
    #allocation2 [shape = 'u8[4096]{0}', space=vmem, size = 0x1000, scoped, tag = 'input window, operand 0, single buffered']
    #allocation3 [shape = 's32[1]{0}', space=sflag, size = 0x4, scoped, tag = 'scoped memory for tpu_custom_call.1']
    #allocation4 [shape = 's32[1]{0}', space=sflag, size = 0x4, scoped, tag = 'scoped memory for tpu_custom_call.1']
    #allocation5 [shape = 'u8[32768]{0}', space=vmem, size = 0x8000, scoped, tag = 'input window, operand 1, single buffered']
    #allocation6 [shape = 's32[1]{0}', space=sflag, size = 0x4, scoped, tag = 'scoped memory for tpu_custom_call.1']
    #allocation7 [shape = 'u8[2048]{0}', space=vmem, size = 0x800, scoped, tag = 'input window, operand 2, single buffered']
    #allocation8 [shape = 'u8[262144]{0}', space=vmem, size = 0x40000, scoped, tag = 'input window, operand 3, single buffered']
    #allocation9 [shape = 's32[1]{0}', space=sflag, size = 0x4, scoped, tag = 'scoped memory for tpu_custom_call.1']
    #allocation10 [shape = 'u8[65536]{0}', space=vmem, size = 0x10000, scoped, tag = 'input window, operand 5, single buffered']
    #allocation11 [shape = 'u8[4096]{0}', space=vmem, size = 0x1000, scoped, tag = 'output window, operand 0, single buffered']
    %12 = vsyncpa [#allocation3], 0
    %13 = vsyncpa [#allocation6], 0
    %14 = vsyncpa [#allocation9], 0
    %15 = vsyncpa [#allocation4], 0
    // Predicated region
    $region2: #{tpu_custom_call.1} parent=1 // pred_check
      _
    $region3: #{tpu_custom_call.1} parent=1 // pred_check_branch
      %17 = sbr.rel (0) target = $region5
    $region4: #{tpu_custom_call.1} parent=1 // pred_region
      %s19 = ssub.s32 128, 128
      %20 = vsyncadd [#allocation3], %s19
      %s22 = sshll.u32 [#allocation2], 4
      %s23 = int_to_ptr.vmem [resolvable:$true] %s22
      %25 = dma.hbm_to_vmem [thread:$0]  %s0, 128, %s23, [#allocation3]
    $region5: #{tpu_custom_call.1} parent=1 // pred_fallthru
      _
    // Predicated region
    $region6: #{tpu_custom_call.1} parent=1 // pred_check
      _
    $region7: #{tpu_custom_call.1} parent=1 // pred_check_branch
      %27 = sbr.rel (0) target = $region9
    $region8: #{tpu_custom_call.1} parent=1 // pred_region
      %s29 = ssub.s32 1024, 1024
      %30 = vsyncadd [#allocation6], %s29
      %s31 = sshll.u32 [#allocation5], 4
      %s32 = int_to_ptr.vmem [resolvable:$true] %s31
      %37 = dma.hbm_to_vmem [thread:$0]  %s1, 1024, %s32, [#allocation6], 256, 256, 16
    $region9: #{tpu_custom_call.1} parent=1 // pred_fallthru
      _
    // Predicated region
    $region10: #{tpu_custom_call.1} parent=1 // pred_check
      _
    $region11: #{tpu_custom_call.1} parent=1 // pred_check_branch
      %39 = sbr.rel (0) target = $region13
    $region12: #{tpu_custom_call.1} parent=1 // pred_region
      %s41 = ssub.s32 64, 64
      %42 = vsyncadd [#allocation6], %s41
      %s44 = sshll.u32 [#allocation7], 4
      %s45 = int_to_ptr.vmem [resolvable:$true] %s44
      %47 = dma.hbm_to_vmem [thread:$0]  %s2, 64, %s45, [#allocation6]
    $region13: #{tpu_custom_call.1} parent=1 // pred_fallthru
      _
    // Predicated region
    $region14: #{tpu_custom_call.1} parent=1 // pred_check
      _
    $region15: #{tpu_custom_call.1} parent=1 // pred_check_branch
      %49 = sbr.rel (0) target = $region17
    $region16: #{tpu_custom_call.1} parent=1 // pred_region
      %s51 = ssub.s32 8192, 8192
      %52 = vsyncadd [#allocation9], %s51
      %s53 = sshll.u32 [#allocation8], 4
      %s54 = int_to_ptr.vmem [resolvable:$true] %s53
      %59 = dma.hbm_to_vmem [thread:$0]  %s3, 8192, %s54, [#allocation9], 128, 128, 8
    $region17: #{tpu_custom_call.1} parent=1 // pred_fallthru
      _
    // Predicated region
    $region18: #{tpu_custom_call.1} parent=1 // pred_check
      _
    $region19: #{tpu_custom_call.1} parent=1 // pred_check_branch
      %61 = sbr.rel (0) target = $region21
    $region20: #{tpu_custom_call.1} parent=1 // pred_region
      _
    $region21: #{tpu_custom_call.1} parent=1 // pred_fallthru
      _
    // Predicated region
    $region22: #{tpu_custom_call.1} parent=1 // pred_check
      _
    $region23: #{tpu_custom_call.1} parent=1 // pred_check_branch
      %63 = sbr.rel (0) target = $region25
    $region24: #{tpu_custom_call.1} parent=1 // pred_region
      %s65 = ssub.s32 2048, 2048
      %66 = vsyncadd [#allocation9], %s65
      %s67 = sshll.u32 [#allocation10], 4
      %s68 = int_to_ptr.vmem [resolvable:$true] %s67
      %73 = dma.hbm_to_vmem [thread:$0]  %s5, 2048, %s68, [#allocation9], 64, 64, 4
    $region25: #{tpu_custom_call.1} parent=1 // pred_fallthru
      _
    // Predicated region
    $region26: #{tpu_custom_call.1} parent=1 // pred_check
      _
    $region27: #{tpu_custom_call.1} parent=1 // pred_check_branch
      %75 = sbr.rel (0) target = $region29
    $region28: #{tpu_custom_call.1} parent=1 // pred_region
      _
    $region29: #{tpu_custom_call.1} parent=1 // pred_fallthru
      _
    // Predicated region
    $region30: #{tpu_custom_call.1} parent=1 // pred_check
      _
    $region31: #{tpu_custom_call.1} parent=1 // pred_check_branch
      %77 = sbr.rel (0) target = $region33
    $region32: #{tpu_custom_call.1} parent=1 // pred_region
      %78 = dma.done [#allocation3], 128
    $region33: #{tpu_custom_call.1} parent=1 // pred_fallthru
      _
    // Predicated region
    $region34: #{tpu_custom_call.1} parent=1 // pred_check
      _
    $region35: #{tpu_custom_call.1} parent=1 // pred_check_branch
      %80 = sbr.rel (0) target = $region37
    $region36: #{tpu_custom_call.1} parent=1 // pred_region
      %81 = dma.done [#allocation6], 1024
    $region37: #{tpu_custom_call.1} parent=1 // pred_fallthru
      _
    // Predicated region
    $region38: #{tpu_custom_call.1} parent=1 // pred_check
      _
    $region39: #{tpu_custom_call.1} parent=1 // pred_check_branch
      %83 = sbr.rel (0) target = $region41
    $region40: #{tpu_custom_call.1} parent=1 // pred_region
      %84 = dma.done [#allocation6], 64
    $region41: #{tpu_custom_call.1} parent=1 // pred_fallthru
      _
    // Predicated region
    $region42: #{tpu_custom_call.1} parent=1 // pred_check
      _
    $region43: #{tpu_custom_call.1} parent=1 // pred_check_branch
      %86 = sbr.rel (0) target = $region45
    $region44: #{tpu_custom_call.1} parent=1 // pred_region
      %87 = dma.done [#allocation9], 8192
    $region45: #{tpu_custom_call.1} parent=1 // pred_fallthru
      _
    // Predicated region
    $region46: #{tpu_custom_call.1} parent=1 // pred_check
      _
    $region47: #{tpu_custom_call.1} parent=1 // pred_check_branch
      %89 = sbr.rel (0) target = $region49
    $region48: #{tpu_custom_call.1} parent=1 // pred_region
      %90 = dma.done [#allocation9], 2048
    $region49: #{tpu_custom_call.1} parent=1 // pred_fallthru
      _
    %v92 = vld [vmem:[#allocation2] sm:$0xff]
    %v93 = vpack.c.bf16 %v92, %v92
    %v94 = vld [vmem:[#allocation5] sm:$0xff]
    %v95 = vld [vmem:[#allocation5 + $0x8] sm:$0xff]
    %v96 = vld [vmem:[#allocation5 + $0x10] sm:$0xff]
    %v97 = vld [vmem:[#allocation5 + $0x18] sm:$0xff]
    %v98 = vld [vmem:[#allocation5 + $0x20] sm:$0xff]
    %v99 = vld [vmem:[#allocation5 + $0x28] sm:$0xff]
    %v100 = vld [vmem:[#allocation5 + $0x30] sm:$0xff]
    %v101 = vld [vmem:[#allocation5 + $0x38] sm:$0xff]
    %v102 = vld [vmem:[#allocation7] sm:$0xf]
    %v104 = vlaneseq
    %v105 = vshrl.u32 %v104, 7
    %v106 = vsub.s32 0, %v105
    %v107 = vrot.slane %v102, %v106
    %v108 = vlaneseq
    %v109 = vshrl.u32 %v108, 7
    %v110 = vsub.s32 1, %v109
    %v111 = vrot.slane %v102, %v110
    %v112 = vlaneseq
    %v113 = vshrl.u32 %v112, 7
    %v114 = vsub.s32 2, %v113
    %v115 = vrot.slane %v102, %v114
    %v116 = vlaneseq
    %v117 = vshrl.u32 %v116, 7
    %v118 = vsub.s32 3, %v117
    %v119 = vrot.slane %v102, %v118
    %v132 = vunpack.c.l.b16 %v94
    %v133 = vunpack.c.h.b16 %v94
    %v134 = vunpack.c.l.b16 %v95
    %v135 = vunpack.c.h.b16 %v95
    %v136 = vunpack.c.l.b16 %v96
    %v137 = vunpack.c.h.b16 %v96
    %v138 = vunpack.c.l.b16 %v97
    %v139 = vunpack.c.h.b16 %v97
    %v140 = vunpack.c.l.b16 %v98
    %v141 = vunpack.c.h.b16 %v98
    %v142 = vunpack.c.l.b16 %v99
    %v143 = vunpack.c.h.b16 %v99
    %v144 = vunpack.c.l.b16 %v100
    %v145 = vunpack.c.h.b16 %v100
    %v146 = vunpack.c.l.b16 %v101
    %v147 = vunpack.c.h.b16 %v101
    %v148 = vpack.c.b16 %v136, %v132
    %v149 = vpack.c.b16 %v137, %v133
    %v150 = vpack.c.b16 %v138, %v134
    %v151 = vpack.c.b16 %v139, %v135
    %v152 = vpack.c.b16 %v144, %v140
    %v153 = vpack.c.b16 %v145, %v141
    %v154 = vpack.c.b16 %v146, %v142
    %v155 = vpack.c.b16 %v147, %v143
    %vm164 = vcmask 261120
    %v166 = vsel %vm164, %v93, 0
    %168 = vmatprep.subr.bf16.mxu0 0
    %169 = vmatpush1.bf16.msra.mxu0 0
    %170 = vmatprep.subr.bf16.mxu0 0
    %171 = vmatpush1.bf16.msra.mxu0 0
    %172 = vmatprep.subr.bf16.mxu0 0
    %173 = vmatpush1.bf16.msra.mxu0 0
    %174 = vmatprep.subr.bf16.mxu0 0
    %175 = vmatpush1.bf16.msra.mxu0 0
    %176 = vmatprep.subr.bf16.mxu0 0
    %177 = vmatpush1.bf16.msra.mxu0 0
    %178 = vmatprep.subr.bf16.mxu0 0
    %179 = vmatpush1.bf16.msra.mxu0 0
    %180 = vmatprep.subr.bf16.mxu0 %v153
    %181 = vmatpush1.bf16.msra.mxu0 %v152
    %182 = vmatprep.subr.bf16.mxu0 %v149
    %183 = vmatpush1.bf16.msra.mxu0 %v148
    %184 = vmatprep.subr.bf16.mxu0 0
    %185 = vmatpush2.bf16.msra.mxu0 0
    %186 = vmatprep.subr.bf16.mxu0 0
    %187 = vmatpush2.bf16.msra.mxu0 0
    %188 = vmatprep.subr.bf16.mxu0 0
    %189 = vmatpush2.bf16.msra.mxu0 0
    %190 = vmatprep.subr.bf16.mxu0 0
    %191 = vmatpush2.bf16.msra.mxu0 0
    %192 = vmatprep.subr.bf16.mxu0 0
    %193 = vmatpush2.bf16.msra.mxu0 0
    %194 = vmatprep.subr.bf16.mxu0 0
    %195 = vmatpush2.bf16.msra.mxu0 0
    %196 = vmatprep.subr.bf16.mxu0 0
    %197 = vmatpush2.bf16.msra.mxu0 0
    %198 = vmatprep.subr.bf16.mxu0 0
    %199 = vmatpush2.bf16.msra.mxu0 0
    %200 = vmatprep.mubr.bf16.mxu0 0
    %201 = vmatmul.mubr.bf16.gmra.mxu0 %v166
    %v202 = vpop.f32.mrf.mxu0
    %v203 = vadd.f32 %v107, %v202
    %v204 = vpop.f32.mrf.mxu0
    %v205 = vadd.f32 %v111, %v204
    %v206 = vpop.f32.mrf.mxu0
    %v207 = vpop.f32.mrf.mxu0
    %208 = vdwg.mxu0
    %209 = vmatprep.subr.bf16.mxu0 0
    %210 = vmatpush1.bf16.msra.mxu0 0
    %211 = vmatprep.subr.bf16.mxu0 0
    %212 = vmatpush1.bf16.msra.mxu0 0
    %213 = vmatprep.subr.bf16.mxu0 0
    %214 = vmatpush1.bf16.msra.mxu0 0
    %215 = vmatprep.subr.bf16.mxu0 0
    %216 = vmatpush1.bf16.msra.mxu0 0
    %217 = vmatprep.subr.bf16.mxu0 0
    %218 = vmatpush1.bf16.msra.mxu0 0
    %219 = vmatprep.subr.bf16.mxu0 0
    %220 = vmatpush1.bf16.msra.mxu0 0
    %221 = vmatprep.subr.bf16.mxu0 %v155
    %222 = vmatpush1.bf16.msra.mxu0 %v154
    %223 = vmatprep.subr.bf16.mxu0 %v151
    %224 = vmatpush1.bf16.msra.mxu0 %v150
    %225 = vmatprep.subr.bf16.mxu0 0
    %226 = vmatpush2.bf16.msra.mxu0 0
    %227 = vmatprep.subr.bf16.mxu0 0
    %228 = vmatpush2.bf16.msra.mxu0 0
    %229 = vmatprep.subr.bf16.mxu0 0
    %230 = vmatpush2.bf16.msra.mxu0 0
    %231 = vmatprep.subr.bf16.mxu0 0
    %232 = vmatpush2.bf16.msra.mxu0 0
    %233 = vmatprep.subr.bf16.mxu0 0
    %234 = vmatpush2.bf16.msra.mxu0 0
    %235 = vmatprep.subr.bf16.mxu0 0
    %236 = vmatpush2.bf16.msra.mxu0 0
    %237 = vmatprep.subr.bf16.mxu0 0
    %238 = vmatpush2.bf16.msra.mxu0 0
    %239 = vmatprep.subr.bf16.mxu0 0
    %240 = vmatpush2.bf16.msra.mxu0 0
    %241 = vmatprep.mubr.bf16.mxu0 0
    %242 = vmatmul.mubr.bf16.gmra.mxu0 %v166
    %v243 = vpop.f32.mrf.mxu0
    %v244 = vadd.f32 %v115, %v243
    %v245 = vpop.f32.mrf.mxu0
    %v246 = vadd.f32 %v119, %v245
    %v247 = vpop.f32.mrf.mxu0
    %v248 = vpop.f32.mrf.mxu0
    %249 = vdwg.mxu0
    %v250 = vmax.f32 %v203, 0.0
    %v251 = vmax.f32 %v205, 0.0
    %v252 = vmax.f32 %v244, 0.0
    %v253 = vmax.f32 %v246, 0.0
    %v254 = vpack.c.bf16 %v250, %v250
    %v255 = vpack.c.bf16 %v251, %v251
    %v256 = vpack.c.bf16 %v252, %v252
    %v257 = vpack.c.bf16 %v253, %v253
    %v258 = vld [vmem:[#allocation8] sm:$0xff]
    %v259 = vld [vmem:[#allocation8 + $0x8] sm:$0xff]
    %v260 = vld [vmem:[#allocation8 + $0x10] sm:$0xff]
    %v261 = vld [vmem:[#allocation8 + $0x18] sm:$0xff]
    %v262 = vld [vmem:[#allocation8 + $0x20] sm:$0xff]
    %v263 = vld [vmem:[#allocation8 + $0x28] sm:$0xff]
    %v264 = vld [vmem:[#allocation8 + $0x30] sm:$0xff]
    %v265 = vld [vmem:[#allocation8 + $0x38] sm:$0xff]
    %v266 = vld [vmem:[#allocation8 + $0x40] sm:$0xff]
    %v267 = vld [vmem:[#allocation8 + $0x48] sm:$0xff]
    %v268 = vld [vmem:[#allocation8 + $0x50] sm:$0xff]
    %v269 = vld [vmem:[#allocation8 + $0x58] sm:$0xff]
    %v270 = vld [vmem:[#allocation8 + $0x60] sm:$0xff]
    %v271 = vld [vmem:[#allocation8 + $0x68] sm:$0xff]
    %v272 = vld [vmem:[#allocation8 + $0x70] sm:$0xff]
    %v273 = vld [vmem:[#allocation8 + $0x78] sm:$0xff]
    %v274 = vld [vmem:[#allocation8 + $0x80] sm:$0xff]
    %v275 = vld [vmem:[#allocation8 + $0x88] sm:$0xff]
    %v276 = vld [vmem:[#allocation8 + $0x90] sm:$0xff]
    %v277 = vld [vmem:[#allocation8 + $0x98] sm:$0xff]
    %v278 = vld [vmem:[#allocation8 + $0xa0] sm:$0xff]
    %v279 = vld [vmem:[#allocation8 + $0xa8] sm:$0xff]
    %v280 = vld [vmem:[#allocation8 + $0xb0] sm:$0xff]
    %v281 = vld [vmem:[#allocation8 + $0xb8] sm:$0xff]
    %v282 = vld [vmem:[#allocation8 + $0xc0] sm:$0xff]
    %v283 = vld [vmem:[#allocation8 + $0xc8] sm:$0xff]
    %v284 = vld [vmem:[#allocation8 + $0xd0] sm:$0xff]
    %v285 = vld [vmem:[#allocation8 + $0xd8] sm:$0xff]
    %v286 = vld [vmem:[#allocation8 + $0xe0] sm:$0xff]
    %v287 = vld [vmem:[#allocation8 + $0xe8] sm:$0xff]
    %v288 = vld [vmem:[#allocation8 + $0xf0] sm:$0xff]
    %v289 = vld [vmem:[#allocation8 + $0xf8] sm:$0xff]
    %v290 = vld [vmem:[#allocation8 + $0x100] sm:$0xff]
    %v291 = vld [vmem:[#allocation8 + $0x108] sm:$0xff]
    %v292 = vld [vmem:[#allocation8 + $0x110] sm:$0xff]
    %v293 = vld [vmem:[#allocation8 + $0x118] sm:$0xff]
    %v294 = vld [vmem:[#allocation8 + $0x120] sm:$0xff]
    %v295 = vld [vmem:[#allocation8 + $0x128] sm:$0xff]
    %v296 = vld [vmem:[#allocation8 + $0x130] sm:$0xff]
    %v297 = vld [vmem:[#allocation8 + $0x138] sm:$0xff]
    %v298 = vld [vmem:[#allocation8 + $0x140] sm:$0xff]
    %v299 = vld [vmem:[#allocation8 + $0x148] sm:$0xff]
    %v300 = vld [vmem:[#allocation8 + $0x150] sm:$0xff]
    %v301 = vld [vmem:[#allocation8 + $0x158] sm:$0xff]
    %v302 = vld [vmem:[#allocation8 + $0x160] sm:$0xff]
    %v303 = vld [vmem:[#allocation8 + $0x168] sm:$0xff]
    %v304 = vld [vmem:[#allocation8 + $0x170] sm:$0xff]
    %v305 = vld [vmem:[#allocation8 + $0x178] sm:$0xff]
    %v306 = vld [vmem:[#allocation8 + $0x180] sm:$0xff]
    %v307 = vld [vmem:[#allocation8 + $0x188] sm:$0xff]
    %v308 = vld [vmem:[#allocation8 + $0x190] sm:$0xff]
    %v309 = vld [vmem:[#allocation8 + $0x198] sm:$0xff]
    %v310 = vld [vmem:[#allocation8 + $0x1a0] sm:$0xff]
    %v311 = vld [vmem:[#allocation8 + $0x1a8] sm:$0xff]
    %v312 = vld [vmem:[#allocation8 + $0x1b0] sm:$0xff]
    %v313 = vld [vmem:[#allocation8 + $0x1b8] sm:$0xff]
    %v314 = vld [vmem:[#allocation8 + $0x1c0] sm:$0xff]
    %v315 = vld [vmem:[#allocation8 + $0x1c8] sm:$0xff]
    %v316 = vld [vmem:[#allocation8 + $0x1d0] sm:$0xff]
    %v317 = vld [vmem:[#allocation8 + $0x1d8] sm:$0xff]
    %v318 = vld [vmem:[#allocation8 + $0x1e0] sm:$0xff]
    %v319 = vld [vmem:[#allocation8 + $0x1e8] sm:$0xff]
    %v320 = vld [vmem:[#allocation8 + $0x1f0] sm:$0xff]
    %v321 = vld [vmem:[#allocation8 + $0x1f8] sm:$0xff]
    %v322 = vld [vmem:[%s4] sm:$0x3]
    %v324 = vlaneseq
    %v325 = vshrl.u32 %v324, 7
    %v326 = vsub.s32 0, %v325
    %v327 = vrot.slane %v322, %v326
    %v328 = vlaneseq
    %v329 = vshrl.u32 %v328, 7
    %v330 = vsub.s32 1, %v329
    %v331 = vrot.slane %v322, %v330
    %v398 = vunpack.c.l.b16 %v258
    %v399 = vunpack.c.h.b16 %v258
    %v400 = vunpack.c.l.b16 %v259
    %v401 = vunpack.c.h.b16 %v259
    %v402 = vunpack.c.l.b16 %v260
    %v403 = vunpack.c.h.b16 %v260
    %v404 = vunpack.c.l.b16 %v261
    %v405 = vunpack.c.h.b16 %v261
    %v406 = vunpack.c.l.b16 %v262
    %v407 = vunpack.c.h.b16 %v262
    %v408 = vunpack.c.l.b16 %v263
    %v409 = vunpack.c.h.b16 %v263
    %v410 = vunpack.c.l.b16 %v264
    %v411 = vunpack.c.h.b16 %v264
    %v412 = vunpack.c.l.b16 %v265
    %v413 = vunpack.c.h.b16 %v265
    %v414 = vunpack.c.l.b16 %v266
    %v415 = vunpack.c.h.b16 %v266
    %v416 = vunpack.c.l.b16 %v267
    %v417 = vunpack.c.h.b16 %v267
    %v418 = vunpack.c.l.b16 %v268
    %v419 = vunpack.c.h.b16 %v268
    %v420 = vunpack.c.l.b16 %v269
    %v421 = vunpack.c.h.b16 %v269
    %v422 = vunpack.c.l.b16 %v270
    %v423 = vunpack.c.h.b16 %v270
    %v424 = vunpack.c.l.b16 %v271
    %v425 = vunpack.c.h.b16 %v271
    %v426 = vunpack.c.l.b16 %v272
    %v427 = vunpack.c.h.b16 %v272
    %v428 = vunpack.c.l.b16 %v273
    %v429 = vunpack.c.h.b16 %v273
    %v430 = vunpack.c.l.b16 %v274
    %v431 = vunpack.c.h.b16 %v274
    %v432 = vunpack.c.l.b16 %v275
    %v433 = vunpack.c.h.b16 %v275
    %v434 = vunpack.c.l.b16 %v276
    %v435 = vunpack.c.h.b16 %v276
    %v436 = vunpack.c.l.b16 %v277
    %v437 = vunpack.c.h.b16 %v277
    %v438 = vunpack.c.l.b16 %v278
    %v439 = vunpack.c.h.b16 %v278
    %v440 = vunpack.c.l.b16 %v279
    %v441 = vunpack.c.h.b16 %v279
    %v442 = vunpack.c.l.b16 %v280
    %v443 = vunpack.c.h.b16 %v280
    %v444 = vunpack.c.l.b16 %v281
    %v445 = vunpack.c.h.b16 %v281
    %v446 = vunpack.c.l.b16 %v282
    %v447 = vunpack.c.h.b16 %v282
    %v448 = vunpack.c.l.b16 %v283
    %v449 = vunpack.c.h.b16 %v283
    %v450 = vunpack.c.l.b16 %v284
    %v451 = vunpack.c.h.b16 %v284
    %v452 = vunpack.c.l.b16 %v285
    %v453 = vunpack.c.h.b16 %v285
    %v454 = vunpack.c.l.b16 %v286
    %v455 = vunpack.c.h.b16 %v286
    %v456 = vunpack.c.l.b16 %v287
    %v457 = vunpack.c.h.b16 %v287
    %v458 = vunpack.c.l.b16 %v288
    %v459 = vunpack.c.h.b16 %v288
    %v460 = vunpack.c.l.b16 %v289
    %v461 = vunpack.c.h.b16 %v289
    %v462 = vunpack.c.l.b16 %v290
    %v463 = vunpack.c.h.b16 %v290
    %v464 = vunpack.c.l.b16 %v291
    %v465 = vunpack.c.h.b16 %v291
    %v466 = vunpack.c.l.b16 %v292
    %v467 = vunpack.c.h.b16 %v292
    %v468 = vunpack.c.l.b16 %v293
    %v469 = vunpack.c.h.b16 %v293
    %v470 = vunpack.c.l.b16 %v294
    %v471 = vunpack.c.h.b16 %v294
    %v472 = vunpack.c.l.b16 %v295
    %v473 = vunpack.c.h.b16 %v295
    %v474 = vunpack.c.l.b16 %v296
    %v475 = vunpack.c.h.b16 %v296
    %v476 = vunpack.c.l.b16 %v297
    %v477 = vunpack.c.h.b16 %v297
    %v478 = vunpack.c.l.b16 %v298
    %v479 = vunpack.c.h.b16 %v298
    %v480 = vunpack.c.l.b16 %v299
    %v481 = vunpack.c.h.b16 %v299
    %v482 = vunpack.c.l.b16 %v300
    %v483 = vunpack.c.h.b16 %v300
    %v484 = vunpack.c.l.b16 %v301
    %v485 = vunpack.c.h.b16 %v301
    %v486 = vunpack.c.l.b16 %v302
    %v487 = vunpack.c.h.b16 %v302
    %v488 = vunpack.c.l.b16 %v303
    %v489 = vunpack.c.h.b16 %v303
    %v490 = vunpack.c.l.b16 %v304
    %v491 = vunpack.c.h.b16 %v304
    %v492 = vunpack.c.l.b16 %v305
    %v493 = vunpack.c.h.b16 %v305
    %v494 = vunpack.c.l.b16 %v306
    %v495 = vunpack.c.h.b16 %v306
    %v496 = vunpack.c.l.b16 %v307
    %v497 = vunpack.c.h.b16 %v307
    %v498 = vunpack.c.l.b16 %v308
    %v499 = vunpack.c.h.b16 %v308
    %v500 = vunpack.c.l.b16 %v309
    %v501 = vunpack.c.h.b16 %v309
    %v502 = vunpack.c.l.b16 %v310
    %v503 = vunpack.c.h.b16 %v310
    %v504 = vunpack.c.l.b16 %v311
    %v505 = vunpack.c.h.b16 %v311
    %v506 = vunpack.c.l.b16 %v312
    %v507 = vunpack.c.h.b16 %v312
    %v508 = vunpack.c.l.b16 %v313
    %v509 = vunpack.c.h.b16 %v313
    %v510 = vunpack.c.l.b16 %v314
    %v511 = vunpack.c.h.b16 %v314
    %v512 = vunpack.c.l.b16 %v315
    %v513 = vunpack.c.h.b16 %v315
    %v514 = vunpack.c.l.b16 %v316
    %v515 = vunpack.c.h.b16 %v316
    %v516 = vunpack.c.l.b16 %v317
    %v517 = vunpack.c.h.b16 %v317
    %v518 = vunpack.c.l.b16 %v318
    %v519 = vunpack.c.h.b16 %v318
    %v520 = vunpack.c.l.b16 %v319
    %v521 = vunpack.c.h.b16 %v319
    %v522 = vunpack.c.l.b16 %v320
    %v523 = vunpack.c.h.b16 %v320
    %v524 = vunpack.c.l.b16 %v321
    %v525 = vunpack.c.h.b16 %v321
    %v526 = vpack.c.b16 %v400, %v398
    %v527 = vpack.c.b16 %v401, %v399
    %v528 = vpack.c.b16 %v404, %v402
    %v529 = vpack.c.b16 %v405, %v403
    %v530 = vpack.c.b16 %v408, %v406
    %v531 = vpack.c.b16 %v409, %v407
    %v532 = vpack.c.b16 %v412, %v410
    %v533 = vpack.c.b16 %v413, %v411
    %v534 = vpack.c.b16 %v416, %v414
    %v535 = vpack.c.b16 %v417, %v415
    %v536 = vpack.c.b16 %v420, %v418
    %v537 = vpack.c.b16 %v421, %v419
    %v538 = vpack.c.b16 %v424, %v422
    %v539 = vpack.c.b16 %v425, %v423
    %v540 = vpack.c.b16 %v428, %v426
    %v541 = vpack.c.b16 %v429, %v427
    %v542 = vpack.c.b16 %v432, %v430
    %v543 = vpack.c.b16 %v433, %v431
    %v544 = vpack.c.b16 %v436, %v434
    %v545 = vpack.c.b16 %v437, %v435
    %v546 = vpack.c.b16 %v440, %v438
    %v547 = vpack.c.b16 %v441, %v439
    %v548 = vpack.c.b16 %v444, %v442
    %v549 = vpack.c.b16 %v445, %v443
    %v550 = vpack.c.b16 %v448, %v446
    %v551 = vpack.c.b16 %v449, %v447
    %v552 = vpack.c.b16 %v452, %v450
    %v553 = vpack.c.b16 %v453, %v451
    %v554 = vpack.c.b16 %v456, %v454
    %v555 = vpack.c.b16 %v457, %v455
    %v556 = vpack.c.b16 %v460, %v458
    %v557 = vpack.c.b16 %v461, %v459
    %v558 = vpack.c.b16 %v464, %v462
    %v559 = vpack.c.b16 %v465, %v463
    %v560 = vpack.c.b16 %v468, %v466
    %v561 = vpack.c.b16 %v469, %v467
    %v562 = vpack.c.b16 %v472, %v470
    %v563 = vpack.c.b16 %v473, %v471
    %v564 = vpack.c.b16 %v476, %v474
    %v565 = vpack.c.b16 %v477, %v475
    %v566 = vpack.c.b16 %v480, %v478
    %v567 = vpack.c.b16 %v481, %v479
    %v568 = vpack.c.b16 %v484, %v482
    %v569 = vpack.c.b16 %v485, %v483
    %v570 = vpack.c.b16 %v488, %v486
    %v571 = vpack.c.b16 %v489, %v487
    %v572 = vpack.c.b16 %v492, %v490
    %v573 = vpack.c.b16 %v493, %v491
    %v574 = vpack.c.b16 %v496, %v494
    %v575 = vpack.c.b16 %v497, %v495
    %v576 = vpack.c.b16 %v500, %v498
    %v577 = vpack.c.b16 %v501, %v499
    %v578 = vpack.c.b16 %v504, %v502
    %v579 = vpack.c.b16 %v505, %v503
    %v580 = vpack.c.b16 %v508, %v506
    %v581 = vpack.c.b16 %v509, %v507
    %v582 = vpack.c.b16 %v512, %v510
    %v583 = vpack.c.b16 %v513, %v511
    %v584 = vpack.c.b16 %v516, %v514
    %v585 = vpack.c.b16 %v517, %v515
    %v586 = vpack.c.b16 %v520, %v518
    %v587 = vpack.c.b16 %v521, %v519
    %v588 = vpack.c.b16 %v524, %v522
    %v589 = vpack.c.b16 %v525, %v523
    %654 = vmatprep.subr.bf16.mxu0 %v541
    %655 = vmatpush1.bf16.msra.mxu0 %v540
    %656 = vmatprep.subr.bf16.mxu0 %v539
    %657 = vmatpush1.bf16.msra.mxu0 %v538
    %658 = vmatprep.subr.bf16.mxu0 %v537
    %659 = vmatpush1.bf16.msra.mxu0 %v536
    %660 = vmatprep.subr.bf16.mxu0 %v535
    %661 = vmatpush1.bf16.msra.mxu0 %v534
    %662 = vmatprep.subr.bf16.mxu0 %v533
    %663 = vmatpush1.bf16.msra.mxu0 %v532
    %664 = vmatprep.subr.bf16.mxu0 %v531
    %665 = vmatpush1.bf16.msra.mxu0 %v530
    %666 = vmatprep.subr.bf16.mxu0 %v529
    %667 = vmatpush1.bf16.msra.mxu0 %v528
    %668 = vmatprep.subr.bf16.mxu0 %v527
    %669 = vmatpush1.bf16.msra.mxu0 %v526
    %670 = vmatprep.subr.bf16.mxu0 %v557
    %671 = vmatpush2.bf16.msra.mxu0 %v556
    %672 = vmatprep.subr.bf16.mxu0 %v555
    %673 = vmatpush2.bf16.msra.mxu0 %v554
    %674 = vmatprep.subr.bf16.mxu0 %v553
    %675 = vmatpush2.bf16.msra.mxu0 %v552
    %676 = vmatprep.subr.bf16.mxu0 %v551
    %677 = vmatpush2.bf16.msra.mxu0 %v550
    %678 = vmatprep.subr.bf16.mxu0 %v549
    %679 = vmatpush2.bf16.msra.mxu0 %v548
    %680 = vmatprep.subr.bf16.mxu0 %v547
    %681 = vmatpush2.bf16.msra.mxu0 %v546
    %682 = vmatprep.subr.bf16.mxu0 %v545
    %683 = vmatpush2.bf16.msra.mxu0 %v544
    %684 = vmatprep.subr.bf16.mxu0 %v543
    %685 = vmatpush2.bf16.msra.mxu0 %v542
    %686 = vmatprep.mubr.bf16.mxu0 %v255
    %687 = vmatmul.mubr.bf16.gmra.mxu0 %v254
    %v688 = vpop.f32.mrf.mxu0
    %v689 = vadd.f32 %v327, %v688
    %v690 = vpop.f32.mrf.mxu0
    %v691 = vadd.f32 %v331, %v690
    %v692 = vpop.f32.mrf.mxu0
    %v693 = vpop.f32.mrf.mxu0
    %694 = vdwg.mxu0
    %695 = vmatprep.subr.bf16.mxu0 %v573
    %696 = vmatpush1.bf16.msra.mxu0 %v572
    %697 = vmatprep.subr.bf16.mxu0 %v571
    %698 = vmatpush1.bf16.msra.mxu0 %v570
    %699 = vmatprep.subr.bf16.mxu0 %v569
    %700 = vmatpush1.bf16.msra.mxu0 %v568
    %701 = vmatprep.subr.bf16.mxu0 %v567
    %702 = vmatpush1.bf16.msra.mxu0 %v566
    %703 = vmatprep.subr.bf16.mxu0 %v565
    %704 = vmatpush1.bf16.msra.mxu0 %v564
    %705 = vmatprep.subr.bf16.mxu0 %v563
    %706 = vmatpush1.bf16.msra.mxu0 %v562
    %707 = vmatprep.subr.bf16.mxu0 %v561
    %708 = vmatpush1.bf16.msra.mxu0 %v560
    %709 = vmatprep.subr.bf16.mxu0 %v559
    %710 = vmatpush1.bf16.msra.mxu0 %v558
    %711 = vmatprep.subr.bf16.mxu0 %v589
    %712 = vmatpush2.bf16.msra.mxu0 %v588
    %713 = vmatprep.subr.bf16.mxu0 %v587
    %714 = vmatpush2.bf16.msra.mxu0 %v586
    %715 = vmatprep.subr.bf16.mxu0 %v585
    %716 = vmatpush2.bf16.msra.mxu0 %v584
    %717 = vmatprep.subr.bf16.mxu0 %v583
    %718 = vmatpush2.bf16.msra.mxu0 %v582
    %719 = vmatprep.subr.bf16.mxu0 %v581
    %720 = vmatpush2.bf16.msra.mxu0 %v580
    %721 = vmatprep.subr.bf16.mxu0 %v579
    %722 = vmatpush2.bf16.msra.mxu0 %v578
    %723 = vmatprep.subr.bf16.mxu0 %v577
    %724 = vmatpush2.bf16.msra.mxu0 %v576
    %725 = vmatprep.subr.bf16.mxu0 %v575
    %726 = vmatpush2.bf16.msra.mxu0 %v574
    %727 = vmatprep.mubr.bf16.mxu0 %v257
    %728 = vmatmul.mubr.bf16.gmra.mxu0 %v256
    %v729 = vpop.f32.mrf.mxu0
    %v730 = vadd.f32 %v689, %v729
    %v731 = vpop.f32.mrf.mxu0
    %v732 = vadd.f32 %v691, %v731
    %v733 = vpop.f32.mrf.mxu0
    %v734 = vpop.f32.mrf.mxu0
    %735 = vdwg.mxu0
    %v736 = vmax.f32 %v730, 0.0
    %v737 = vmax.f32 %v732, 0.0
    %v738 = vpack.c.bf16 %v736, %v736
    %v739 = vpack.c.bf16 %v737, %v737
    %v740 = vld [vmem:[#allocation10] sm:$0xf]
    %v741 = vld [vmem:[#allocation10 + $0x4] sm:$0xf]
    %v742 = vld [vmem:[#allocation10 + $0x8] sm:$0xf]
    %v743 = vld [vmem:[#allocation10 + $0xc] sm:$0xf]
    %v744 = vld [vmem:[#allocation10 + $0x10] sm:$0xf]
    %v745 = vld [vmem:[#allocation10 + $0x14] sm:$0xf]
    %v746 = vld [vmem:[#allocation10 + $0x18] sm:$0xf]
    %v747 = vld [vmem:[#allocation10 + $0x1c] sm:$0xf]
    %v748 = vld [vmem:[#allocation10 + $0x20] sm:$0xf]
    %v749 = vld [vmem:[#allocation10 + $0x24] sm:$0xf]
    %v750 = vld [vmem:[#allocation10 + $0x28] sm:$0xf]
    %v751 = vld [vmem:[#allocation10 + $0x2c] sm:$0xf]
    %v752 = vld [vmem:[#allocation10 + $0x30] sm:$0xf]
    %v753 = vld [vmem:[#allocation10 + $0x34] sm:$0xf]
    %v754 = vld [vmem:[#allocation10 + $0x38] sm:$0xf]
    %v755 = vld [vmem:[#allocation10 + $0x3c] sm:$0xf]
    %v756 = vld [vmem:[#allocation10 + $0x40] sm:$0xf]
    %v757 = vld [vmem:[#allocation10 + $0x44] sm:$0xf]
    %v758 = vld [vmem:[#allocation10 + $0x48] sm:$0xf]
    %v759 = vld [vmem:[#allocation10 + $0x4c] sm:$0xf]
    %v760 = vld [vmem:[#allocation10 + $0x50] sm:$0xf]
    %v761 = vld [vmem:[#allocation10 + $0x54] sm:$0xf]
    %v762 = vld [vmem:[#allocation10 + $0x58] sm:$0xf]
    %v763 = vld [vmem:[#allocation10 + $0x5c] sm:$0xf]
    %v764 = vld [vmem:[#allocation10 + $0x60] sm:$0xf]
    %v765 = vld [vmem:[#allocation10 + $0x64] sm:$0xf]
    %v766 = vld [vmem:[#allocation10 + $0x68] sm:$0xf]
    %v767 = vld [vmem:[#allocation10 + $0x6c] sm:$0xf]
    %v768 = vld [vmem:[#allocation10 + $0x70] sm:$0xf]
    %v769 = vld [vmem:[#allocation10 + $0x74] sm:$0xf]
    %v770 = vld [vmem:[#allocation10 + $0x78] sm:$0xf]
    %v771 = vld [vmem:[#allocation10 + $0x7c] sm:$0xf]
    %v772 = vld [vmem:[%s6] sm:$0x1]
    %v774 = vlaneseq
    %v775 = vshrl.u32 %v774, 7
    %v776 = vsub.s32 0, %v775
    %v777 = vrot.slane %v772, %v776
    %v811 = vunpack.c.l.b16 %v740
    %v812 = vunpack.c.l.b16 %v741
    %v813 = vunpack.c.l.b16 %v742
    %v814 = vunpack.c.l.b16 %v743
    %v815 = vunpack.c.l.b16 %v744
    %v816 = vunpack.c.l.b16 %v745
    %v817 = vunpack.c.l.b16 %v746
    %v818 = vunpack.c.l.b16 %v747
    %v819 = vunpack.c.l.b16 %v748
    %v820 = vunpack.c.l.b16 %v749
    %v821 = vunpack.c.l.b16 %v750
    %v822 = vunpack.c.l.b16 %v751
    %v823 = vunpack.c.l.b16 %v752
    %v824 = vunpack.c.l.b16 %v753
    %v825 = vunpack.c.l.b16 %v754
    %v826 = vunpack.c.l.b16 %v755
    %v827 = vunpack.c.l.b16 %v756
    %v828 = vunpack.c.l.b16 %v757
    %v829 = vunpack.c.l.b16 %v758
    %v830 = vunpack.c.l.b16 %v759
    %v831 = vunpack.c.l.b16 %v760
    %v832 = vunpack.c.l.b16 %v761
    %v833 = vunpack.c.l.b16 %v762
    %v834 = vunpack.c.l.b16 %v763
    %v835 = vunpack.c.l.b16 %v764
    %v836 = vunpack.c.l.b16 %v765
    %v837 = vunpack.c.l.b16 %v766
    %v838 = vunpack.c.l.b16 %v767
    %v839 = vunpack.c.l.b16 %v768
    %v840 = vunpack.c.l.b16 %v769
    %v841 = vunpack.c.l.b16 %v770
    %v842 = vunpack.c.l.b16 %v771
    %v843 = vpack.c.b16 %v812, %v811
    %v844 = vpack.c.b16 %v814, %v813
    %v845 = vpack.c.b16 %v816, %v815
    %v846 = vpack.c.b16 %v818, %v817
    %v847 = vpack.c.b16 %v820, %v819
    %v848 = vpack.c.b16 %v822, %v821
    %v849 = vpack.c.b16 %v824, %v823
    %v850 = vpack.c.b16 %v826, %v825
    %v851 = vpack.c.b16 %v828, %v827
    %v852 = vpack.c.b16 %v830, %v829
    %v853 = vpack.c.b16 %v832, %v831
    %v854 = vpack.c.b16 %v834, %v833
    %v855 = vpack.c.b16 %v836, %v835
    %v856 = vpack.c.b16 %v838, %v837
    %v857 = vpack.c.b16 %v840, %v839
    %v858 = vpack.c.b16 %v842, %v841
    %875 = vmatprep.subr.bf16.mxu0 0
    %876 = vmatpush1.bf16.msra.mxu0 %v850
    %877 = vmatprep.subr.bf16.mxu0 0
    %878 = vmatpush1.bf16.msra.mxu0 %v849
    %879 = vmatprep.subr.bf16.mxu0 0
    %880 = vmatpush1.bf16.msra.mxu0 %v848
    %881 = vmatprep.subr.bf16.mxu0 0
    %882 = vmatpush1.bf16.msra.mxu0 %v847
    %883 = vmatprep.subr.bf16.mxu0 0
    %884 = vmatpush1.bf16.msra.mxu0 %v846
    %885 = vmatprep.subr.bf16.mxu0 0
    %886 = vmatpush1.bf16.msra.mxu0 %v845
    %887 = vmatprep.subr.bf16.mxu0 0
    %888 = vmatpush1.bf16.msra.mxu0 %v844
    %889 = vmatprep.subr.bf16.mxu0 0
    %890 = vmatpush1.bf16.msra.mxu0 %v843
    %891 = vmatprep.subr.bf16.mxu0 0
    %892 = vmatpush2.bf16.msra.mxu0 %v858
    %893 = vmatprep.subr.bf16.mxu0 0
    %894 = vmatpush2.bf16.msra.mxu0 %v857
    %895 = vmatprep.subr.bf16.mxu0 0
    %896 = vmatpush2.bf16.msra.mxu0 %v856
    %897 = vmatprep.subr.bf16.mxu0 0
    %898 = vmatpush2.bf16.msra.mxu0 %v855
    %899 = vmatprep.subr.bf16.mxu0 0
    %900 = vmatpush2.bf16.msra.mxu0 %v854
    %901 = vmatprep.subr.bf16.mxu0 0
    %902 = vmatpush2.bf16.msra.mxu0 %v853
    %903 = vmatprep.subr.bf16.mxu0 0
    %904 = vmatpush2.bf16.msra.mxu0 %v852
    %905 = vmatprep.subr.bf16.mxu0 0
    %906 = vmatpush2.bf16.msra.mxu0 %v851
    %907 = vmatprep.mubr.bf16.mxu0 %v739
    %908 = vmatmul.mubr.bf16.gmra.mxu0 %v738
    %v909 = vpop.f32.mrf.mxu0
    %v910 = vadd.f32 %v777, %v909
    %v911 = vpop.f32.mrf.mxu0
    %v912 = vpop.f32.mrf.mxu0
    %v913 = vpop.f32.mrf.mxu0
    %914 = vdwg.mxu0
    %v915 = vmax.f32 %v910, 0.0
    %916 = vst [vmem:[#allocation11] sm:$0xff] %v915
    // Predicated region
    $region50: #{tpu_custom_call.1} parent=1 // pred_check
      _
    $region51: #{tpu_custom_call.1} parent=1 // pred_check_branch
      %918 = sbr.rel (0) target = $region53
    $region52: #{tpu_custom_call.1} parent=1 // pred_region
      %s920 = ssub.s32 128, 128
      %921 = vsyncadd [#allocation4], %s920
      %s923 = sshll.u32 [#allocation11], 4
      %s924 = int_to_ptr.vmem [resolvable:$true] %s923
      %926 = dma.vmem_to_hbm [thread:$0]  %s924, 128, %s7, [#allocation4]
    $region53: #{tpu_custom_call.1} parent=1 // pred_fallthru
      _
    // Predicated region
    $region54: #{tpu_custom_call.1} parent=1 // pred_check
      _
    $region55: #{tpu_custom_call.1} parent=1 // pred_check_branch
      %928 = sbr.rel (0) target = $region57
    $region56: #{tpu_custom_call.1} parent=1 // pred_region
      %929 = dma.done [#allocation4], 128
    $region57: #{tpu_custom_call.1} parent=1 // pred_fallthru
      _
    %930 = vsyncpa [#allocation3], 1
    %931 = vsyncpa [#allocation6], 1
    %932 = vsyncpa [#allocation9], 1
    %933 = vsyncpa [#allocation4], 1

</llo_original>
